<compile_context>
chip_gen: v7x
topology: tpu7x:2x2x1
jax: 0.10.0
libtpu: 0.0.40
codegen_flags: <defaults>
</compile_context>

<pallas_src>
import jax
import jax.numpy as jnp
from jax.experimental import pallas as pl
from jax.experimental.pallas import tpu as pltpu


def _score_kernel(w_ref, pos_ref, neg_ref, out_ref):
    # VPU subtract, then a single native (M,K)x(K,N) MXU pass, f32 accumulation.
    diff = pos_ref[...] - neg_ref[...]                       # (tile, K)
    s = jnp.dot(diff, w_ref[...],                            # (tile, n_out)
                preferred_element_type=jnp.float32)
    out_ref[...] = (1.0 - s) ** 2


def _round_down(x, m):
    return (x // m) * m


def _round_up(x, m):
    return ((x + m - 1) // m) * m


def _pick_tile_rows(total_rows, hbm_row_bytes, vmem_row_bytes, *,
                    target_step_bytes=4 << 20,    # >= ~2-4 us of DMA per step
                    vmem_budget_bytes=20 << 20,   # streamed inputs, 2 bufs each
                    min_grid_steps=4):            # keep both v7x TCs busy
    """Rows per grid step for a kernel streaming two row-major inputs."""
    rows_dma = max(8, target_step_bytes // (2 * hbm_row_bytes))
    rows_vmem = max(8, vmem_budget_bytes // (4 * vmem_row_bytes))
    rows_grid = max(8, pl.cdiv(total_rows, min_grid_steps))
    tile = min(rows_dma, rows_vmem, rows_grid)
    tile = max(8, _round_down(tile, 8))                       # sublane multiple
    tile = min(tile, max(8, _round_up(total_rows, 8)))        # never exceed data
    return tile


def mtl_auc_lr_forward(M, N, pos, neg, i, *, tile_rows=None):
    """M:(d,k), N:(T,k), pos:(N_m,d), neg:(N_m,d), i:int -> pred:(N_m,) float32."""
    d = M.shape[0]
    Nm = pos.shape[0]
    compute_dtype = pos.dtype
    itemsize = jnp.dtype(compute_dtype).itemsize

    # w_i = row i of (M @ N^T)^T == N[i] @ M^T  -- tiny, hoisted out of the kernel.
    w = jnp.matmul(N[i], M.T).astype(compute_dtype)           # (d,)

    packed = (128 % d == 0) and (Nm % (128 // d) == 0)

    if packed:
        # Pack P consecutive rows into one 128-lane row (free contiguous reshape,
        # no HBM copy). Contract against a block-diagonal (128, P) copy of w:
        # column j holds w at rows [j*d, (j+1)*d), so out[r, j] is the score of
        # original row r*P + j and out.reshape(-1) is in original row order.
        P = 128 // d
        R = Nm // P
        pos2 = pos.reshape(R, 128)
        neg2 = neg.reshape(R, 128)
        wmat = jnp.kron(jnp.eye(P, dtype=jnp.float32),
                        w.reshape(d, 1).astype(jnp.float32)).astype(compute_dtype)
        total_rows, k_dim, n_out = R, 128, P
        hbm_row_bytes = 128 * itemsize
        vmem_row_bytes = 128 * itemsize                       # already lane-dense
    else:
        # General path: (tile, d) blocks are lane-padded to ceil(d/128)*128 in
        # VMEM -- account for that so big tiles don't over-commit VMEM.
        pos2, neg2 = pos, neg
        wmat = w.reshape(d, 1)
        total_rows, k_dim, n_out = Nm, d, 1
        hbm_row_bytes = d * itemsize
        vmem_row_bytes = _round_up(d, 128) * itemsize

    if tile_rows is None:
        tile_rows = _pick_tile_rows(total_rows, hbm_row_bytes, vmem_row_bytes)
    tile_rows = max(8, _round_down(tile_rows, 8))

    grid = (pl.cdiv(total_rows, tile_rows),)

    cost = pl.CostEstimate(
        flops=3 * Nm * d + 2 * Nm,                            # sub + dot + epilogue
        transcendentals=0,
        bytes_accessed=2 * Nm * d * itemsize + k_dim * n_out * itemsize + Nm * 4,
    )

    out = pl.pallas_call(
        _score_kernel,
        out_shape=jax.ShapeDtypeStruct((total_rows, n_out), jnp.float32),
        grid=grid,
        in_specs=[
            pl.BlockSpec((k_dim, n_out), lambda j: (0, 0)),       # w: VMEM-resident
            pl.BlockSpec((tile_rows, k_dim), lambda j: (j, 0)),   # pos tile
            pl.BlockSpec((tile_rows, k_dim), lambda j: (j, 0)),   # neg tile
        ],
        out_specs=pl.BlockSpec((tile_rows, n_out), lambda j: (j, 0)),
        compiler_params=pltpu.CompilerParams(
            dimension_semantics=("parallel",),                    # v7x: 2 TCs
            vmem_limit_bytes=32 * 1024 * 1024),                   # raise v5e default
        cost_estimate=cost,
    )(wmat, pos2, neg2)

    # Ragged last block: only rows < total_rows are valid writes; the reshape
    # below consumes exactly the Nm valid scores (invariant relied upon above).
    return out.reshape(Nm)


if __name__ == "__main__":
    # Small, deterministic shapes consistent with the module.
    d = 32     # feature number
    k = 16     # factorization rank
    T = 4      # task number
    Nm = 512   # instances per task
    task_i = 1

    key = jax.random.PRNGKey(0)
    kM, kN, kp, kn = jax.random.split(key, 4)
    M = jax.random.normal(kM, (d, k), dtype=jnp.float32) * 0.1
    N = jax.random.normal(kN, (T, k), dtype=jnp.float32) * 0.1
    pos = jax.random.normal(kp, (Nm, d), dtype=jnp.float32)
    neg = jax.random.normal(kn, (Nm, d), dtype=jnp.float32)

    def ref(M, N, pos, neg, i):
        w_ref = jnp.matmul(M, N.T).T[i]                               # (d,)
        return (1.0 - jnp.matmul(w_ref, pos.T) + jnp.matmul(w_ref, neg.T)) ** 2

    # 1) Packed lane-dense path (128 % d == 0), multi-step grid.
    pred = mtl_auc_lr_forward(M, N, pos, neg, task_i)
    jax.block_until_ready(pred)
    assert pred.shape == (Nm,)
    assert jnp.allclose(pred, ref(M, N, pos, neg, task_i), atol=2e-5, rtol=2e-5)

    # 2) Packed path with a ragged last grid block (no wrapper-side padding copy).
    Nm2 = 300
    pred2 = mtl_auc_lr_forward(M, N, pos[:Nm2], neg[:Nm2], task_i)
    jax.block_until_ready(pred2)
    assert pred2.shape == (Nm2,)
    assert jnp.allclose(pred2, ref(M, N, pos[:Nm2], neg[:Nm2], task_i),
                        atol=2e-5, rtol=2e-5)

    # 3) General fallback path (d does not divide 128), ragged last block.
    d3, Nm3 = 48, 200
    kM3, kN3, kp3, kn3 = jax.random.split(jax.random.PRNGKey(1), 4)
    M3 = jax.random.normal(kM3, (d3, k), dtype=jnp.float32) * 0.1
    N3 = jax.random.normal(kN3, (T, k), dtype=jnp.float32) * 0.1
    pos3 = jax.random.normal(kp3, (Nm3, d3), dtype=jnp.float32)
    neg3 = jax.random.normal(kn3, (Nm3, d3), dtype=jnp.float32)
    pred3 = mtl_auc_lr_forward(M3, N3, pos3, neg3, task_i)
    jax.block_until_ready(pred3)
    assert pred3.shape == (Nm3,)
    assert jnp.allclose(pred3, ref(M3, N3, pos3, neg3, task_i),
                        atol=2e-5, rtol=2e-5)

    print("KERNEL_OK")
</pallas_src>

<mosaic_0001>
module attributes {stable_mosaic.version = 11 : i64} {
  func.func @_score_kernel(%arg0: i32, %arg1: memref<128x4xf32, #tpu.memory_space<vmem>>, %arg2: memref<32x128xf32, #tpu.memory_space<vmem>>, %arg3: memref<32x128xf32, #tpu.memory_space<vmem>>, %arg4: memref<32x4xf32, #tpu.memory_space<vmem>>) attributes {dimension_semantics = [#tpu.dimension_semantics<parallel>], iteration_bounds = array<i64: 4>, scalar_prefetch = 0 : i64, scratch_operands = 0 : i64, tpu.core_type = #tpu.core_type<tc>, window_params = [{pipeline_mode = #tpu.pipeline_mode<synchronous>, transform_indices = @transform_0, window_bounds = array<i64: 128, 4>}, {transform_indices = @transform_1, window_bounds = array<i64: 32, 128>}, {transform_indices = @transform_2, window_bounds = array<i64: 32, 128>}, {transform_indices = @transform_3, window_bounds = array<i64: 32, 4>}]} {
    %c0 = arith.constant 0 : index
    %c0_0 = arith.constant 0 : index
    %0 = vector.load %arg2[%c0, %c0_0] : memref<32x128xf32, #tpu.memory_space<vmem>>, vector<32x128xf32>
    %c0_1 = arith.constant 0 : index
    %c0_2 = arith.constant 0 : index
    %1 = vector.load %arg3[%c0_1, %c0_2] : memref<32x128xf32, #tpu.memory_space<vmem>>, vector<32x128xf32>
    %2 = arith.subf %0, %1 : vector<32x128xf32>
    %c0_3 = arith.constant 0 : index
    %c0_4 = arith.constant 0 : index
    %3 = vector.load %arg1[%c0_3, %c0_4] : memref<128x4xf32, #tpu.memory_space<vmem>>, vector<128x4xf32>
    %cst = arith.constant dense<0.000000e+00> : vector<32x4xf32>
    %4 = tpu.matmul %2, %3, %cst {dimension_numbers = #tpu.dot_dimension_numbers<[1], [0], [0], [1], [0, 0, 1, 1], [], []>} : vector<32x128xf32>, vector<128x4xf32>, vector<32x4xf32> -> vector<32x4xf32>
    %cst_5 = arith.constant 1.000000e+00 : f32
    %5 = vector.broadcast %cst_5 : f32 to vector<32x4xf32>
    %6 = arith.subf %5, %4 : vector<32x4xf32>
    %7 = arith.mulf %6, %6 : vector<32x4xf32>
    %c0_6 = arith.constant 0 : index
    %c0_7 = arith.constant 0 : index
    %8 = vector.load %arg4[%c0_6, %c0_7] : memref<32x4xf32, #tpu.memory_space<vmem>>, vector<32x4xf32>
    tpu.vector_store %arg4[%c0_6, %c0_7], %7 {strides = array<i32>} : memref<32x4xf32, #tpu.memory_space<vmem>>, vector<32x4xf32>,
    return
  }
  func.func @transform_0(%arg0: i32) -> (i32, i32) {
    %c0_i32 = arith.constant 0 : i32
    %c0_i32_0 = arith.constant 0 : i32
    %c0_i32_1 = arith.constant 0 : i32
    return %c0_i32, %c0_i32_0 : i32, i32
  }
  func.func @transform_1(%arg0: i32) -> (i32, i32) {
    %c0_i32 = arith.constant 0 : i32
    %c0_i32_0 = arith.constant 0 : i32
    return %arg0, %c0_i32 : i32, i32
  }
  func.func @transform_2(%arg0: i32) -> (i32, i32) {
    %c0_i32 = arith.constant 0 : i32
    %c0_i32_0 = arith.constant 0 : i32
    return %arg0, %c0_i32 : i32, i32
  }
  func.func @transform_3(%arg0: i32) -> (i32, i32) {
    %c0_i32 = arith.constant 0 : i32
    %c0_i32_0 = arith.constant 0 : i32
    return %arg0, %c0_i32 : i32, i32
  }
}

</mosaic_0001>

<llo_original>
// kernel: tpu_custom_call.1
$region0: #{tpu_custom_call.1}
  #allocation0 [shape = 'u32[]', space=smem, size = 0x4, offset = 0x4, fixed_abs, tag = 'smem constant byte address 0x4 - core index']
  #allocation1 [shape = 'u32[144,128]{1,0:T(1,128)}', space=vmem, size = 0x12000, scoped, tag = 'internal scratch']
  %s0 = inlined_call_operand.vmem [shape: f32[128,4], index: 0, kind: input, shape index: {}]
  %s1 = inlined_call_operand.vmem [shape: f32[128,128], index: 1, kind: input, shape index: {}]
  %s2 = inlined_call_operand.hbm [shape: f32[128,128], index: 2, kind: input, shape index: {}]
  %s3 = inlined_call_operand.vmem [shape: f32[128,4], index: 3, kind: output, shape index: {}]
  %s4 = sld [smem:[#allocation0]]
  $region49: #{tpu_custom_call.1} parent=0
    _
  %s6 = ssub.s32 1, %s4
  %s7 = scalar_select 0, %s6, %s4
  $region1: #{tpu_custom_call.1} parent=0
    #allocation2 [shape = 'u8[32768]{0}', space=vmem, size = 0x8000, scoped, tag = 'input window, operand 2']
    #allocation3 [shape = 's32[2]{0}', space=sflag, size = 0x8, scoped, tag = 'scoped memory for tpu_custom_call.1']
    %8 = vsyncpa [#allocation3], 0
    %s9 = scalar_lea.sflag [#allocation3], 1
    %10 = vsyncpa %s9, 0
    loop: start=0, step=1, limit=6
    $region2: #{tpu_custom_call.1} parent=1 // loop_pre_header
      _
    $region3: #{tpu_custom_call.1} parent=1 // loop_header
      %s12 = sphi 0, %s16
      %p13 = scmp.ge.s32.totalorder %s12, 6
      %s20 = sphi 0, %s20
      %s22 = sphi 0, %s20
      %s23 = sphi 0, %s22
      %s37 = sphi 0, %s23
      %s43 = sphi 0, %s45
      %s46 = sphi 0, %s43
      %s47 = sphi 0, %s46
      %s63 = sphi 0, %s47
      %s69 = sphi 0, %s71
      %s72 = sphi 0, %s69
      %s73 = sphi 0, %s72
      %s89 = sphi 0, %s73
      %s95 = sphi 0, %s97
      %s98 = sphi 0, %s95
      %s99 = sphi 0, %s98
      %s115 = sphi 0, %s99
    $region4: #{tpu_custom_call.1} parent=1 // loop_header_branch
      %15 = sbr.rel (%p13) target = $region8
    $region5: #{tpu_custom_call.1} parent=1 // loop_body
      %s17 = ssub.s32 %s12, 1
      %s18 = ssub.s32 %s12, 2
      %s19 = sadd.s32 %s12, 1
      %s21 = sadd.s32 %s20, 1
      %p24 = scmp.eq.s32.totalorder %s12, 3
      %p25 = scmp.ne.s32.totalorder %s20, %s22
      %p26 = scmp.eq.s32.totalorder %s12, 0
      %p27 = por %p25, %p26
      %p28 = scmp.ne.s32.totalorder %s20, %s22
      %p29 = scmp.eq.s32.totalorder %s17, 3
      %p30 = por %p28, %p29
      %p31 = scmp.ne.s32.totalorder %s22, %s23
      %p32 = scmp.eq.s32.totalorder %s17, 0
      %p33 = por %p31, %p32
      %p34 = scmp.ne.s32.totalorder %s22, %s23
      %p35 = scmp.eq.s32.totalorder %s18, 3
      %p36 = por %p34, %p35
      %p38 = scmp.ne.s32.totalorder %s23, %s37
      %p39 = scmp.eq.s32.totalorder %s18, 0
      %p40 = por %p38, %p39
      %s41 = ssub.s32 %s12, %s19
      %p42 = scmp.eq.s32.totalorder %s41, 0
      %s44 = sadd.s32 %s43, 1
      %s45 = scalar_select %p42, %s43, %s44
      %p48 = pneg %p42
      %p49 = scmp.eq.s32.totalorder %s12, 3
      %p50 = por %p48, %p49
      %p51 = scmp.ne.s32.totalorder %s43, %s46
      %p52 = scmp.eq.s32.totalorder %s12, 0
      %p53 = por %p51, %p52
      %p54 = scmp.ne.s32.totalorder %s43, %s46
      %p55 = scmp.eq.s32.totalorder %s17, 3
      %p56 = por %p54, %p55
      %p57 = scmp.ne.s32.totalorder %s46, %s47
      %p58 = scmp.eq.s32.totalorder %s17, 0
      %p59 = por %p57, %p58
      %p60 = scmp.ne.s32.totalorder %s46, %s47
      %p61 = scmp.eq.s32.totalorder %s18, 3
      %p62 = por %p60, %p61
      %p64 = scmp.ne.s32.totalorder %s47, %s63
      %p65 = scmp.eq.s32.totalorder %s18, 0
      %p66 = por %p64, %p65
      %s67 = ssub.s32 %s12, %s19
      %p68 = scmp.eq.s32.totalorder %s67, 0
      %s70 = sadd.s32 %s69, 1
      %s71 = scalar_select %p68, %s69, %s70
      %p74 = pneg %p68
      %p75 = scmp.eq.s32.totalorder %s12, 3
      %p76 = por %p74, %p75
      %p77 = scmp.ne.s32.totalorder %s69, %s72
      %p78 = scmp.eq.s32.totalorder %s12, 0
      %p79 = por %p77, %p78
      %p80 = scmp.ne.s32.totalorder %s69, %s72
      %p81 = scmp.eq.s32.totalorder %s17, 3
      %p82 = por %p80, %p81
      %p83 = scmp.ne.s32.totalorder %s72, %s73
      %p84 = scmp.eq.s32.totalorder %s17, 0
      %p85 = por %p83, %p84
      %p86 = scmp.ne.s32.totalorder %s72, %s73
      %p87 = scmp.eq.s32.totalorder %s18, 3
      %p88 = por %p86, %p87
      %p90 = scmp.ne.s32.totalorder %s73, %s89
      %p91 = scmp.eq.s32.totalorder %s18, 0
      %p92 = por %p90, %p91
      %s93 = ssub.s32 %s12, %s19
      %p94 = scmp.eq.s32.totalorder %s93, 0
      %s96 = sadd.s32 %s95, 1
      %s97 = scalar_select %p94, %s95, %s96
      %p100 = pneg %p94
      %p101 = scmp.eq.s32.totalorder %s12, 3
      %p102 = por %p100, %p101
      %p103 = scmp.ne.s32.totalorder %s95, %s98
      %p104 = scmp.eq.s32.totalorder %s12, 0
      %p105 = por %p103, %p104
      %p106 = scmp.ne.s32.totalorder %s95, %s98
      %p107 = scmp.eq.s32.totalorder %s17, 3
      %p108 = por %p106, %p107
      %p109 = scmp.ne.s32.totalorder %s98, %s99
      %p110 = scmp.eq.s32.totalorder %s17, 0
      %p111 = por %p109, %p110
      %p112 = scmp.ne.s32.totalorder %s98, %s99
      %p113 = scmp.eq.s32.totalorder %s18, 3
      %p114 = por %p112, %p113
      %p116 = scmp.ne.s32.totalorder %s99, %s115
      %p117 = scmp.eq.s32.totalorder %s18, 0
      %p118 = por %p116, %p117
      %p119 = scmp.le.s32.totalorder 1, %s12
      %p120 = scmp.lt.s32.totalorder %s12, 5
      %p121 = pnand %p119, %p120
      %p122 = pneg %p121
      // Predicated region
      $region9: #{tpu_custom_call.1} parent=5 // pred_check
        _
      $region10: #{tpu_custom_call.1} parent=5 // pred_check_branch
        %124 = sbr.rel (%p121) target = $region12
      $region11: #{tpu_custom_call.1} parent=5 // pred_region
        %s125 = ssub.s32 %s12, 1
        // Predicated region
        $region13: #{tpu_custom_call.1} parent=11 // pred_check
          %p126 = pneg %p33
        $region14: #{tpu_custom_call.1} parent=11 // pred_check_branch
          %128 = sbr.rel (%p126) target = $region16
        $region15: #{tpu_custom_call.1} parent=11 // pred_region
          _
        $region16: #{tpu_custom_call.1} parent=11 // pred_fallthru
          _
      $region12: #{tpu_custom_call.1} parent=5 // pred_fallthru
        _
      %p129 = scmp.lt.s32.totalorder %s12, 4
      // Predicated region
      $region17: #{tpu_custom_call.1} parent=5 // pred_check
        %p130 = pneg %p129
      $region18: #{tpu_custom_call.1} parent=5 // pred_check_branch
        %132 = sbr.rel (%p130) target = $region20
      $region19: #{tpu_custom_call.1} parent=5 // pred_region
        // Predicated region
        $region21: #{tpu_custom_call.1} parent=19 // pred_check
          %p133 = pneg %p53
        $region22: #{tpu_custom_call.1} parent=19 // pred_check_branch
          %135 = sbr.rel (%p133) target = $region24
        $region23: #{tpu_custom_call.1} parent=19 // pred_region
          %s136 = smul.u32 4, %s12
          %p137 = scmp.lt.s32.totalorder %s136, 15
          %s138 = scalar_select %p137, %s136, 15
          %s139 = smul.addr %s138, 8
          %s140 = scalar_lea.vmem %s1, %s139
          %s141 = smul.u32 4, %s12
        $region24: #{tpu_custom_call.1} parent=19 // pred_fallthru
          _
        // Predicated region
        $region25: #{tpu_custom_call.1} parent=19 // pred_check
          %p142 = pneg %p79
        $region26: #{tpu_custom_call.1} parent=19 // pred_check_branch
          %144 = sbr.rel (%p142) target = $region28
        $region27: #{tpu_custom_call.1} parent=19 // pred_region
          %s145 = sand.u32 %s69, 1
          %s146 = scalar_lea.sflag [#allocation3], %s145
          %s147 = sand.u32 %s69, 1
          %s148 = smul.addr %s147, 32
          %s149 = scalar_lea.vmem [#allocation2], %s148
          %s150 = smul.u32 4, %s12
          %s152 = ssub.s32 512, 512
          %153 = vsyncadd %s146, %s152
          %s154 = smul.addr %s150, 128
          %s155 = scalar_lea.hbm %s2, %s154
          %s156 = sshll.u32 %s149, 4
          %s157 = int_to_ptr.vmem [resolvable:$true] %s156
          %162 = dma.hbm_to_vmem [thread:$0]  %s155, 512, %s157, %s146, 128, 128, 8
        $region28: #{tpu_custom_call.1} parent=19 // pred_fallthru
          _
      $region20: #{tpu_custom_call.1} parent=5 // pred_fallthru
        _
      %p163 = scmp.le.s32.totalorder 1, %s12
      %p164 = scmp.lt.s32.totalorder %s12, 5
      %p165 = pnand %p163, %p164
      %p166 = pneg %p165
      // Predicated region
      $region29: #{tpu_custom_call.1} parent=5 // pred_check
        _
      $region30: #{tpu_custom_call.1} parent=5 // pred_check_branch
        %168 = sbr.rel (%p165) target = $region32
      $region31: #{tpu_custom_call.1} parent=5 // pred_region
        %s169 = ssub.s32 %s12, 1
        %s170 = sand.u32 %s72, 1
        %s171 = scalar_lea.sflag [#allocation3], %s170
        %s172 = sand.u32 %s72, 1
        %s173 = smul.addr %s172, 32
        %s174 = scalar_lea.vmem [#allocation2], %s173
        // Predicated region
        $region33: #{tpu_custom_call.1} parent=31 // pred_check
          %p175 = pneg %p85
        $region34: #{tpu_custom_call.1} parent=31 // pred_check_branch
          %177 = sbr.rel (%p175) target = $region36
        $region35: #{tpu_custom_call.1} parent=31 // pred_region
          %178 = dma.done %s171, 512
        $region36: #{tpu_custom_call.1} parent=31 // pred_fallthru
          _
        %p179 = pneg %p33
        %p180 = pneg %p30
        %s181 = smul.u32 4, %s17
        %p182 = scmp.lt.s32.totalorder %s181, 15
        %s183 = scalar_select %p182, %s181, 15
        %s184 = smul.addr %s183, 8
        %s185 = scalar_lea.vmem %s1, %s184
        %p186 = pneg %p59
        %p187 = pneg %p56
        %s188 = sand.u32 %s72, 1
        %s189 = scalar_lea.sflag [#allocation3], %s188
        %s190 = sand.u32 %s72, 1
        %s191 = smul.addr %s190, 32
        %s192 = scalar_lea.vmem [#allocation2], %s191
        %p193 = pneg %p85
        %p194 = pneg %p82
        %p195 = pneg %p111
        %p196 = pneg %p108
        %s197 = smul.u32 4, %s17
        %p198 = scmp.lt.s32.totalorder %s197, 15
        %s199 = scalar_select %p198, %s197, 15
        %s200 = smul.addr %s199, 8
        %s201 = scalar_lea.vmem %s3, %s200
        %s202 = smul.u32 4, %s17
        %p203 = scmp.lt.s32.totalorder %s202, 15
        %s204 = scalar_select %p203, %s202, 15
        %s205 = smul.addr %s204, 8
        %s206 = scalar_lea.vmem %s1, %s205
        %s207 = smul.u32 4, %s17
        %s208 = smul.u32 4, %s17
        %s209 = smul.u32 4, %s17
        %p210 = scmp.lt.s32.totalorder %s209, 15
        %s211 = scalar_select %p210, %s209, 15
        %s212 = smul.addr %s211, 8
        %s213 = scalar_lea.vmem %s3, %s212
        %s214 = smul.u32 4, %s17
        %v215 = vld [vmem:[%s206] sm:$0xff]
        %v216 = vld [vmem:[%s206 + $0x8] sm:$0xff]
        %v217 = vld [vmem:[%s206 + $0x10] sm:$0xff]
        %v218 = vld [vmem:[%s206 + $0x18] sm:$0xff]
        %v219 = vld [vmem:[%s174] sm:$0xff]
        %v220 = vld [vmem:[%s174 + $0x8] sm:$0xff]
        %v221 = vld [vmem:[%s174 + $0x10] sm:$0xff]
        %v222 = vld [vmem:[%s174 + $0x18] sm:$0xff]
        %v223 = vsub.f32 %v215, %v219
        %v224 = vsub.f32 %v216, %v220
        %v225 = vsub.f32 %v217, %v221
        %v226 = vsub.f32 %v218, %v222
        %v227 = vld [vmem:[%s0] sm:$0xff]
        %v228 = vld [vmem:[%s0 + $0x8] sm:$0xff]
        %v229 = vld [vmem:[%s0 + $0x10] sm:$0xff]
        %v230 = vld [vmem:[%s0 + $0x18] sm:$0xff]
        %v231 = vld [vmem:[%s0 + $0x20] sm:$0xff]
        %v232 = vld [vmem:[%s0 + $0x28] sm:$0xff]
        %v233 = vld [vmem:[%s0 + $0x30] sm:$0xff]
        %v234 = vld [vmem:[%s0 + $0x38] sm:$0xff]
        %v235 = vld [vmem:[%s0 + $0x40] sm:$0xff]
        %v236 = vld [vmem:[%s0 + $0x48] sm:$0xff]
        %v237 = vld [vmem:[%s0 + $0x50] sm:$0xff]
        %v238 = vld [vmem:[%s0 + $0x58] sm:$0xff]
        %v239 = vld [vmem:[%s0 + $0x60] sm:$0xff]
        %v240 = vld [vmem:[%s0 + $0x68] sm:$0xff]
        %v241 = vld [vmem:[%s0 + $0x70] sm:$0xff]
        %v242 = vld [vmem:[%s0 + $0x78] sm:$0xff]
        %243 = vmatprep.subr.mxu0 0.0
        %244 = vmatpush1.msra.mxu0 %v227
        %245 = vmatprep.subr.mxu0 0.0
        %246 = vmatpush1.msra.mxu0 %v228
        %247 = vmatprep.subr.mxu0 0.0
        %248 = vmatpush1.msra.mxu0 %v229
        %249 = vmatprep.subr.mxu0 0.0
        %250 = vmatpush1.msra.mxu0 %v230
        %251 = vmatprep.subr.mxu0 0.0
        %252 = vmatpush1.msra.mxu0 %v231
        %253 = vmatprep.subr.mxu0 0.0
        %254 = vmatpush1.msra.mxu0 %v232
        %255 = vmatprep.subr.mxu0 0.0
        %256 = vmatpush1.msra.mxu0 %v233
        %257 = vmatprep.subr.mxu0 0.0
        %258 = vmatpush1.msra.mxu0 %v234
        %259 = vmatprep.subr.mxu0 0.0
        %260 = vmatpush1.msra.mxu0 %v235
        %261 = vmatprep.subr.mxu0 0.0
        %262 = vmatpush1.msra.mxu0 %v236
        %263 = vmatprep.subr.mxu0 0.0
        %264 = vmatpush1.msra.mxu0 %v237
        %265 = vmatprep.subr.mxu0 0.0
        %266 = vmatpush1.msra.mxu0 %v238
        %267 = vmatprep.subr.mxu0 0.0
        %268 = vmatpush1.msra.mxu0 %v239
        %269 = vmatprep.subr.mxu0 0.0
        %270 = vmatpush1.msra.mxu0 %v240
        %271 = vmatprep.subr.mxu0 0.0
        %272 = vmatpush1.msra.mxu0 %v241
        %273 = vmatprep.subr.mxu0 0.0
        %274 = vmatpush1.msra.mxu0 %v242
        %275 = vmatprep.subr.mxu0 0.0
        %276 = vmatpush1.msra.mxu0 0.0
        %277 = vmatprep.subr.mxu0 0.0
        %278 = vmatpush1.msra.mxu0 0.0
        %279 = vmatprep.subr.mxu0 0.0
        %280 = vmatpush1.msra.mxu0 0.0
        %281 = vmatprep.subr.mxu0 0.0
        %282 = vmatpush1.msra.mxu0 0.0
        %283 = vmatprep.subr.mxu0 0.0
        %284 = vmatpush1.msra.mxu0 0.0
        %285 = vmatprep.subr.mxu0 0.0
        %286 = vmatpush1.msra.mxu0 0.0
        %287 = vmatprep.subr.mxu0 0.0
        %288 = vmatpush1.msra.mxu0 0.0
        %289 = vmatprep.subr.mxu0 0.0
        %290 = vmatpush1.msra.mxu0 0.0
        %291 = vmatprep.subr.mxu0 0.0
        %292 = vmatpush1.msra.mxu0 0.0
        %293 = vmatprep.subr.mxu0 0.0
        %294 = vmatpush1.msra.mxu0 0.0
        %295 = vmatprep.subr.mxu0 0.0
        %296 = vmatpush1.msra.mxu0 0.0
        %297 = vmatprep.subr.mxu0 0.0
        %298 = vmatpush1.msra.mxu0 0.0
        %299 = vmatprep.subr.mxu0 0.0
        %300 = vmatpush1.msra.mxu0 0.0
        %301 = vmatprep.subr.mxu0 0.0
        %302 = vmatpush1.msra.mxu0 0.0
        %303 = vmatprep.subr.mxu0 0.0
        %304 = vmatpush1.msra.mxu0 0.0
        %305 = vmatprep.subr.mxu0 0.0
        %306 = vmatpush1.msra.mxu0 0.0
        %307 = vmatprep.mubr.f32.mxu0 0.0
        %308 = vmatmul.mubr.f32.gmra.mrb[0].mxu0 %v223
        %v309 = vpop.f32.mrb[0].mxu0
        %v310 = vadd.f32 0.0, %v309
        %v311 = vpop.f32.mrb[0].mxu0
        %312 = vmatprep.mubr.f32.mxu0 0.0
        %313 = vmatmul.mubr.f32.gmra.mrb[0].mxu0 %v224
        %v314 = vpop.f32.mrb[0].mxu0
        %v315 = vadd.f32 0.0, %v314
        %v316 = vpop.f32.mrb[0].mxu0
        %317 = vmatprep.mubr.f32.mxu0 0.0
        %318 = vmatmul.mubr.f32.gmra.mrb[0].mxu0 %v225
        %v319 = vpop.f32.mrb[0].mxu0
        %v320 = vadd.f32 0.0, %v319
        %v321 = vpop.f32.mrb[0].mxu0
        %322 = vmatprep.mubr.f32.mxu0 0.0
        %323 = vmatmul.mubr.f32.gmra.mrb[0].mxu0 %v226
        %v324 = vpop.f32.mrb[0].mxu0
        %v325 = vadd.f32 0.0, %v324
        %v326 = vpop.f32.mrb[0].mxu0
        %327 = vdwg.mxu0
        %v328 = vsub.f32 1.0, %v310
        %v329 = vsub.f32 1.0, %v315
        %v330 = vsub.f32 1.0, %v320
        %v331 = vsub.f32 1.0, %v325
        %v332 = vmul.f32 %v328, %v328
        %v333 = vmul.f32 %v329, %v329
        %v334 = vmul.f32 %v330, %v330
        %v335 = vmul.f32 %v331, %v331
        %vm336 = vcmask 31744
        %337 = vst.msk [vmem:[%s213] sm:$0xff] %vm336, %v332
        %338 = vst.msk [vmem:[%s213 + $0x8] sm:$0xff] %vm336, %v333
        %339 = vst.msk [vmem:[%s213 + $0x10] sm:$0xff] %vm336, %v334
        %340 = vst.msk [vmem:[%s213 + $0x18] sm:$0xff] %vm336, %v335
        %s341 = smul.u32 4, %s17
        %p342 = scmp.lt.s32.totalorder %s341, 15
        %s343 = scalar_select %p342, %s341, 15
        %s344 = smul.addr %s343, 8
        %s345 = scalar_lea.vmem %s3, %s344
        // Predicated region
        $region37: #{tpu_custom_call.1} parent=31 // pred_check
          %p346 = pneg %p108
        $region38: #{tpu_custom_call.1} parent=31 // pred_check_branch
          %348 = sbr.rel (%p346) target = $region40
        $region39: #{tpu_custom_call.1} parent=31 // pred_region
          %s349 = smul.u32 4, %s17
        $region40: #{tpu_custom_call.1} parent=31 // pred_fallthru
          _
      $region32: #{tpu_custom_call.1} parent=5 // pred_fallthru
        _
      %p350 = scmp.le.s32.totalorder 2, %s12
      // Predicated region
      $region41: #{tpu_custom_call.1} parent=5 // pred_check
        %p351 = pneg %p350
      $region42: #{tpu_custom_call.1} parent=5 // pred_check_branch
        %353 = sbr.rel (%p351) target = $region44
      $region43: #{tpu_custom_call.1} parent=5 // pred_region
        %s354 = ssub.s32 %s12, 2
        // Predicated region
        $region45: #{tpu_custom_call.1} parent=43 // pred_check
          %p355 = pneg %p114
        $region46: #{tpu_custom_call.1} parent=43 // pred_check_branch
          %357 = sbr.rel (%p355) target = $region48
        $region47: #{tpu_custom_call.1} parent=43 // pred_region
          %s358 = smul.u32 4, %s18
          %p359 = scmp.lt.s32.totalorder %s358, 15
          %s360 = scalar_select %p359, %s358, 15
          %s361 = smul.addr %s360, 8
          %s362 = scalar_lea.vmem %s3, %s361
        $region48: #{tpu_custom_call.1} parent=43 // pred_fallthru
          _
      $region44: #{tpu_custom_call.1} parent=5 // pred_fallthru
        _
    $region6: #{tpu_custom_call.1} parent=1 // loop_footer
      %s16 = sadd.s32 1, %s12
    $region7: #{tpu_custom_call.1} parent=1 // loop_footer_branch
      %11 = sbr.rel target = $region3
    $region8: #{tpu_custom_call.1} parent=1 // loop_exit
      _
    %363 = vsyncpa [#allocation3], 1
    %s364 = scalar_lea.sflag [#allocation3], 1
    %365 = vsyncpa %s364, 1

</llo_original>
